<compile_context>
chip_gen: v7x
topology: tpu7x:2x2x1
jax: 0.10.0
libtpu: 0.0.40
codegen_flags: <defaults>
</compile_context>

<pallas_src>
import functools
import math

import jax
import jax.numpy as jnp
from jax.experimental import pallas as pl
from jax.experimental.pallas import tpu as pltpu

_LANES = 128
_SUBLANES = 8
_INV_SQRT2 = 1.0 / math.sqrt(2.0)
_TANH_C = math.sqrt(2.0 / math.pi)


def _regression_kernel(x_ref, w1t_ref, w2_ref, out_ref, acc_ref, *,
                       tn, kt_per_split, n_valid, inv_n, approx_gelu):
    # x_ref:   (tn, D)     one row tile (sequence positions) of one batch element
    # w1t_ref: (H, D)      first linear layer, pre-transposed (resident)
    # w2_ref:  (H, 1)      second linear layer as a column vector (resident)
    # out_ref: (1, LANES)  lane-dense output slab for this (batch, row-split)
    # acc_ref: (1, tn)     f32 lane-wise accumulator, persistent across the k axis
    s = pl.program_id(1)
    k = pl.program_id(2)

    @pl.when(k == 0)
    def _init():
        acc_ref[...] = jnp.zeros_like(acc_ref)

    # MXU, A @ B^T form: (H, D) x (tn, D) -> (H, tn).  Output is lane-dense along
    # tn, so the whole post-matmul VPU/EUP/XLU path touches 4x fewer vregs than a
    # (tn, Hp=128) zero-padded orientation.  f32 accumulation.
    h = jax.lax.dot_general(
        w1t_ref[...], x_ref[...], (((1,), (1,)), ((), ())),
        preferred_element_type=jnp.float32)

    if approx_gelu:
        # tanh GELU: shifts work onto the (otherwise idle) EUP slot.
        # Numerics-visible (~1e-3) vs. torch.nn.GELU() default.
        h = 0.5 * h * (1.0 + jnp.tanh(_TANH_C * (h + 0.044715 * h * h * h)))
    else:
        # exact erf GELU (matches torch.nn.GELU() default)
        h = 0.5 * h * (1.0 + jax.lax.erf(h * _INV_SQRT2))

    # H -> 1 projection: VPU broadcast-multiply + XLU sublane reduce (keeps the
    # MXU slot for the real matmul only).
    partial = jnp.sum(h * w2_ref[...], axis=0, keepdims=True)          # (1, tn)

    # In-kernel mask for the ragged / overhanging tail (replaces wrapper jnp.pad).
    tile_off = (s * kt_per_split + k) * tn
    col = jax.lax.broadcasted_iota(jnp.int32, (1, tn), 1)
    partial = jnp.where(tile_off + col < n_valid, partial, 0.0)

    acc_ref[...] += partial

    @pl.when(k == pl.num_programs(2) - 1)
    def _finalize():
        # lane reduction + mean; broadcast so the store is lane-dense / unmasked
        tot = jnp.sum(acc_ref[...], axis=1, keepdims=True) * jnp.float32(inv_n)
        out_ref[...] = jnp.broadcast_to(tot, out_ref.shape)


def regression_forward(x, w1, w2, *, tile_n=4096, row_splits=None,
                       input_dtype=jnp.bfloat16, approx_gelu=False):
    """Forward of `Regression`: mean_n( GELU(x @ w1) @ w2 ).

    x: (B, N, 2*C) float; w1: (2*C, H); w2: (H, 1).  Returns (B,) float32.
    """
    B, N, D = x.shape
    H = w1.shape[1]
    assert w1.shape == (D, H) and w2.shape == (H, 1)

    in_dtype = jnp.dtype(input_dtype)
    xp = x.astype(in_dtype)                 # x is otherwise untouched (no HBM pad/copy)
    w1t = w1.astype(in_dtype).T             # (H, D) for the A @ B^T MXU form (tiny)
    w2c = w2.astype(jnp.float32)            # (H, 1), post-matmul math stays f32

    # Row tile: as big as possible (grid-step overhead dominates otherwise).
    # Sublane granule depends on dtype packing (8 rows for f32, 16 for bf16).
    granule = _SUBLANES * max(1, 4 // in_dtype.itemsize)
    cap = max(granule, (int(tile_n) // granule) * granule)
    tn = N if N <= cap else cap             # full-extent block or granule multiple
    total_k = pl.cdiv(N, tn)

    # Optional parallel split of the row axis: feeds both v7x TensorCores when B is
    # small.  Per-split partial means are summed in the wrapper (the reduction axis
    # itself is never split across cores, so the accumulator stays correct).
    if row_splits is None:
        row_splits = 2 if B == 1 else 1
    S = max(1, min(int(row_splits), total_k))
    kt = pl.cdiv(total_k, S)

    kernel = functools.partial(
        _regression_kernel, tn=tn, kt_per_split=kt, n_valid=N, inv_n=1.0 / N,
        approx_gelu=approx_gelu)

    def x_map(b, s, k):
        # Clamp so overhanging (fully masked) split tiles stay in bounds.
        return (b, jnp.minimum(s * kt + k, total_k - 1), 0)

    out = pl.pallas_call(
        kernel,
        out_shape=jax.ShapeDtypeStruct((B, S, _LANES), jnp.float32),
        grid=(B, S, kt),
        in_specs=[
            pl.BlockSpec((None, tn, D), x_map),                 # x row tiles (pipelined)
            pl.BlockSpec((H, D), lambda b, s, k: (0, 0)),       # w1^T (resident)
            pl.BlockSpec((H, 1), lambda b, s, k: (0, 0)),       # w2   (resident)
        ],
        out_specs=pl.BlockSpec((None, 1, _LANES), lambda b, s, k: (b, s, 0)),
        scratch_shapes=[pltpu.VMEM((1, tn), jnp.float32)],
        compiler_params=pltpu.CompilerParams(
            dimension_semantics=("parallel", "parallel", "arbitrary")),
    )(xp, w1t, w2c)

    # sum per-split partial means, then mean(dim=1).squeeze(-1) -> (B,)
    return jnp.sum(out, axis=1)[:, 0]


def _reference(x, w1, w2):
    hp = jax.lax.Precision.HIGHEST
    h = jnp.einsum("bnd,dh->bnh", x, w1, precision=hp)
    h = 0.5 * h * (1.0 + jax.lax.erf(h * _INV_SQRT2))
    y = jnp.einsum("bnh,ho->bno", h, w2, precision=hp)       # (B, N, 1)
    return jnp.mean(y, axis=1)[..., 0]                       # (B,)


if __name__ == "__main__":
    # cfg.channels[-1] = 16 -> D_in = 2*16 = 32 ; cfg.reg_hidden_dim = 32
    B, N, C, H = 2, 8, 16, 32
    D_in = 2 * C

    key = jax.random.PRNGKey(0)
    kx, k1, k2 = jax.random.split(key, 3)

    x = jax.random.normal(kx, (B, N, D_in), dtype=jnp.float32)
    # torch Linear default init: U(-1/sqrt(fan_in), 1/sqrt(fan_in)); stored (in, out)
    w1 = jax.random.uniform(k1, (D_in, H), jnp.float32,
                            -1.0 / math.sqrt(D_in), 1.0 / math.sqrt(D_in))
    w2 = jax.random.uniform(k2, (H, 1), jnp.float32,
                            -1.0 / math.sqrt(H), 1.0 / math.sqrt(H))

    ref = _reference(x, w1, w2)

    # f32 path: matches the PyTorch reference to tight tolerance
    out_f32 = jax.block_until_ready(
        regression_forward(x, w1, w2, input_dtype=jnp.float32))
    assert out_f32.shape == (B,)
    assert jnp.allclose(out_f32, ref, atol=1e-5, rtol=1e-5), (out_f32, ref)

    # default perf path: bf16 inputs (f32 accumulation) -> looser tolerance
    out_bf16 = jax.block_until_ready(regression_forward(x, w1, w2))
    assert out_bf16.shape == (B,)
    assert jnp.allclose(out_bf16, ref, atol=5e-2, rtol=5e-2), (out_bf16, ref)

    # ragged N + partial tiles + explicit row splits (small-B v7x path), f32
    N2 = 300
    x2 = jax.random.normal(jax.random.PRNGKey(1), (B, N2, D_in), dtype=jnp.float32)
    ref2 = _reference(x2, w1, w2)
    out2 = jax.block_until_ready(
        regression_forward(x2, w1, w2, tile_n=128, row_splits=2,
                           input_dtype=jnp.float32))
    assert jnp.allclose(out2, ref2, atol=1e-4, rtol=1e-4), (out2, ref2)

    print("KERNEL_OK")
</pallas_src>

<mosaic_0001>
module attributes {stable_mosaic.version = 11 : i64} {
  func.func @_regression_kernel(%arg0: i32, %arg1: i32, %arg2: i32, %arg3: memref<1x8x32xf32, #tpu.memory_space<vmem>>, %arg4: memref<32x32xf32, #tpu.memory_space<vmem>>, %arg5: memref<32x1xf32, #tpu.memory_space<vmem>>, %arg6: memref<1x1x128xf32, #tpu.memory_space<vmem>>, %arg7: memref<1x8xf32, #tpu.memory_space<vmem>>) attributes {dimension_semantics = [#tpu.dimension_semantics<parallel>, #tpu.dimension_semantics<parallel>, #tpu.dimension_semantics<arbitrary>], iteration_bounds = array<i64: 2, 1, 1>, scalar_prefetch = 0 : i64, scratch_operands = 1 : i64, tpu.core_type = #tpu.core_type<tc>, window_params = [{transform_indices = @transform_0, window_bounds = array<i64: 1, 8, 32>}, {pipeline_mode = #tpu.pipeline_mode<synchronous>, transform_indices = @transform_1, window_bounds = array<i64: 32, 32>}, {pipeline_mode = #tpu.pipeline_mode<synchronous>, transform_indices = @transform_2, window_bounds = array<i64: 32, 1>}, {transform_indices = @transform_3, window_bounds = array<i64: 1, 1, 128>}]} {
    %c0_i32 = arith.constant 0 : i32
    %0 = arith.cmpi eq, %arg2, %c0_i32 : i32
    %1 = arith.extui %0 : i1 to i32
    %c0_i32_0 = arith.constant 0 : i32
    %2 = arith.cmpi ne, %1, %c0_i32_0 : i32
    scf.if %2 {
      %cst_19 = arith.constant 0.000000e+00 : f32
      %36 = vector.broadcast %cst_19 : f32 to vector<1x8xf32>
      %c0_20 = arith.constant 0 : index
      %c0_21 = arith.constant 0 : index
      %37 = vector.load %arg7[%c0_20, %c0_21] : memref<1x8xf32, #tpu.memory_space<vmem>>, vector<1x8xf32>
      tpu.vector_store %arg7[%c0_20, %c0_21], %36 {strides = array<i32>} : memref<1x8xf32, #tpu.memory_space<vmem>>, vector<1x8xf32>,
    } else {
    }
    %c0 = arith.constant 0 : index
    %c0_1 = arith.constant 0 : index
    %3 = vector.load %arg4[%c0, %c0_1] : memref<32x32xf32, #tpu.memory_space<vmem>>, vector<32x32xf32>
    %c0_2 = arith.constant 0 : index
    %c0_3 = arith.constant 0 : index
    %c0_4 = arith.constant 0 : index
    %4 = vector.load %arg3[%c0_2, %c0_3, %c0_4] : memref<1x8x32xf32, #tpu.memory_space<vmem>>, vector<1x8x32xf32>
    %5 = vector.shape_cast %4 : vector<1x8x32xf32> to vector<8x32xf32>
    %cst = arith.constant dense<0.000000e+00> : vector<32x8xf32>
    %6 = tpu.matmul %3, %5, %cst {dimension_numbers = #tpu.dot_dimension_numbers<[1], [1], [0], [0], [0, 0, 1, 0], [], []>} : vector<32x32xf32>, vector<8x32xf32>, vector<32x8xf32> -> vector<32x8xf32>
    %cst_5 = arith.constant 5.000000e-01 : f32
    %7 = vector.broadcast %cst_5 : f32 to vector<32x8xf32>
    %8 = arith.mulf %7, %6 : vector<32x8xf32>
    %cst_6 = arith.constant 0.707106769 : f32
    %9 = vector.broadcast %cst_6 : f32 to vector<32x8xf32>
    %10 = arith.mulf %6, %9 : vector<32x8xf32>
    %11 = math.erf %10 : vector<32x8xf32>
    %cst_7 = arith.constant 1.000000e+00 : f32
    %12 = vector.broadcast %cst_7 : f32 to vector<32x8xf32>
    %13 = arith.addf %12, %11 : vector<32x8xf32>
    %14 = arith.mulf %8, %13 : vector<32x8xf32>
    %c0_8 = arith.constant 0 : index
    %c0_9 = arith.constant 0 : index
    %15 = vector.load %arg5[%c0_8, %c0_9] : memref<32x1xf32, #tpu.memory_space<vmem>>, vector<32x1xf32>
    %16 = vector.broadcast %15 : vector<32x1xf32> to vector<32x8xf32>
    %17 = arith.mulf %14, %16 : vector<32x8xf32>
    %cst_10 = arith.constant dense<0.000000e+00> : vector<8xf32>
    %18 = vector.multi_reduction <add>, %17, %cst_10 [0] : vector<32x8xf32> to vector<8xf32>
    %19 = vector.shape_cast %18 : vector<8xf32> to vector<1x8xf32>
    %c1_i32 = arith.constant 1 : i32
    %20 = arith.muli %arg1, %c1_i32 : i32
    %21 = arith.addi %20, %arg2 : i32
    %c8_i32 = arith.constant 8 : i32
    %22 = arith.muli %21, %c8_i32 : i32
    %23 = tpu.iota {dimensions = array<i32: 1>} : vector<1x8xi32>
    %24 = vector.broadcast %22 : i32 to vector<1x8xi32>
    %25 = arith.addi %24, %23 : vector<1x8xi32>
    %c8_i32_11 = arith.constant 8 : i32
    %26 = vector.broadcast %c8_i32_11 : i32 to vector<1x8xi32>
    %27 = arith.cmpi slt, %25, %26 : vector<1x8xi32>
    %cst_12 = arith.constant 0.000000e+00 : f32
    %28 = vector.broadcast %cst_12 : f32 to vector<1x8xf32>
    %29 = arith.select %27, %19, %28 : vector<1x8xi1>, vector<1x8xf32>
    %c0_13 = arith.constant 0 : index
    %c0_14 = arith.constant 0 : index
    %30 = vector.load %arg7[%c0_13, %c0_14] : memref<1x8xf32, #tpu.memory_space<vmem>>, vector<1x8xf32>
    %31 = arith.addf %30, %29 : vector<1x8xf32>
    %c0_15 = arith.constant 0 : index
    %c0_16 = arith.constant 0 : index
    %32 = vector.load %arg7[%c0_15, %c0_16] : memref<1x8xf32, #tpu.memory_space<vmem>>, vector<1x8xf32>
    tpu.vector_store %arg7[%c0_15, %c0_16], %31 {strides = array<i32>} : memref<1x8xf32, #tpu.memory_space<vmem>>, vector<1x8xf32>,
    %c0_i32_17 = arith.constant 0 : i32
    %33 = arith.cmpi eq, %arg2, %c0_i32_17 : i32
    %34 = arith.extui %33 : i1 to i32
    %c0_i32_18 = arith.constant 0 : i32
    %35 = arith.cmpi ne, %34, %c0_i32_18 : i32
    scf.if %35 {
      %c0_19 = arith.constant 0 : index
      %c0_20 = arith.constant 0 : index
      %36 = vector.load %arg7[%c0_19, %c0_20] : memref<1x8xf32, #tpu.memory_space<vmem>>, vector<1x8xf32>
      %cst_21 = arith.constant dense<0.000000e+00> : vector<1xf32>
      %37 = vector.multi_reduction <add>, %36, %cst_21 [1] : vector<1x8xf32> to vector<1xf32>
      %38 = vector.shape_cast %37 : vector<1xf32> to vector<1x1xf32>
      %cst_22 = arith.constant 1.250000e-01 : f32
      %39 = vector.broadcast %cst_22 : f32 to vector<1x1xf32>
      %40 = arith.mulf %38, %39 : vector<1x1xf32>
      %41 = vector.shape_cast %40 : vector<1x1xf32> to vector<1x1xf32>
      %42 = vector.broadcast %41 : vector<1x1xf32> to vector<1x128xf32>
      %c0_23 = arith.constant 0 : index
      %c0_24 = arith.constant 0 : index
      %c0_25 = arith.constant 0 : index
      %43 = vector.load %arg6[%c0_23, %c0_24, %c0_25] : memref<1x1x128xf32, #tpu.memory_space<vmem>>, vector<1x1x128xf32>
      %44 = vector.shape_cast %43 : vector<1x1x128xf32> to vector<1x128xf32>
      %45 = vector.shape_cast %42 : vector<1x128xf32> to vector<1x1x128xf32>
      tpu.vector_store %arg6[%c0_23, %c0_24, %c0_25], %45 {strides = array<i32>} : memref<1x1x128xf32, #tpu.memory_space<vmem>>, vector<1x1x128xf32>,
    } else {
    }
    return
  }
  func.func @transform_0(%arg0: i32, %arg1: i32, %arg2: i32) -> (i32, i32, i32) {
    %c1_i32 = arith.constant 1 : i32
    %0 = arith.muli %arg1, %c1_i32 : i32
    %1 = arith.addi %0, %arg2 : i32
    %c0_i32 = arith.constant 0 : i32
    %2 = arith.minsi %1, %c0_i32 : i32
    %c0_i32_0 = arith.constant 0 : i32
    %c0_i32_1 = arith.constant 0 : i32
    return %arg0, %2, %c0_i32_0 : i32, i32, i32
  }
  func.func @transform_1(%arg0: i32, %arg1: i32, %arg2: i32) -> (i32, i32) {
    %c0_i32 = arith.constant 0 : i32
    %c0_i32_0 = arith.constant 0 : i32
    %c0_i32_1 = arith.constant 0 : i32
    return %c0_i32, %c0_i32_0 : i32, i32
  }
  func.func @transform_2(%arg0: i32, %arg1: i32, %arg2: i32) -> (i32, i32) {
    %c0_i32 = arith.constant 0 : i32
    %c0_i32_0 = arith.constant 0 : i32
    %c0_i32_1 = arith.constant 0 : i32
    return %c0_i32, %c0_i32_0 : i32, i32
  }
  func.func @transform_3(%arg0: i32, %arg1: i32, %arg2: i32) -> (i32, i32, i32) {
    %c0_i32 = arith.constant 0 : i32
    %c0_i32_0 = arith.constant 0 : i32
    return %arg0, %arg1, %c0_i32 : i32, i32, i32
  }
}

</mosaic_0001>

<llo_original>
// kernel: tpu_custom_call.1
$region0: #{tpu_custom_call.1}
  #allocation0 [shape = 'u32[]', space=smem, size = 0x4, offset = 0x4, fixed_abs, tag = 'smem constant byte address 0x4 - core index']
  #allocation1 [shape = 'u32[144,128]{1,0:T(1,128)}', space=vmem, size = 0x12000, scoped, tag = 'internal scratch']
  #allocation2 [shape = 'f32[1,8]{1,0:T(1,128)}', space=vmem, size = 0x200, scoped, tag = 'scratch operand']
  %s0 = inlined_call_operand.hbm [shape: f32[2,8,32], index: 0, kind: input, shape index: {}]
  %s1 = inlined_call_operand.vmem [shape: f32[32,32], index: 1, kind: input, shape index: {}]
  %s2 = inlined_call_operand.vmem [shape: f32[32,1], index: 2, kind: input, shape index: {}]
  %s3 = inlined_call_operand.hbm [shape: f32[2,1,128], index: 3, kind: output, shape index: {}]
  %s4 = sld [smem:[#allocation0]]
  $region57: #{tpu_custom_call.1} parent=0
    _
  %s6 = ssub.s32 1, %s4
  %s7 = scalar_select 0, %s6, %s4
  $region1: #{tpu_custom_call.1} parent=0
    #allocation3 [shape = 'u8[8192]{0}', space=vmem, size = 0x2000, scoped, tag = 'input window, operand 0']
    #allocation4 [shape = 's32[2]{0}', space=sflag, size = 0x8, scoped, tag = 'scoped memory for tpu_custom_call.1']
    #allocation5 [shape = 's32[2]{0}', space=sflag, size = 0x8, scoped, tag = 'scoped memory for tpu_custom_call.1']
    #allocation6 [shape = 'u8[1024]{0}', space=vmem, size = 0x400, scoped, tag = 'output window, operand 0']
    %8 = vsyncpa [#allocation4], 0
    %s9 = scalar_lea.sflag [#allocation4], 1
    %10 = vsyncpa %s9, 0
    %11 = vsyncpa [#allocation5], 0
    %s12 = scalar_lea.sflag [#allocation5], 1
    %13 = vsyncpa %s12, 0
    loop: start=0, step=1, limit=4
    $region2: #{tpu_custom_call.1} parent=1 // loop_pre_header
      _
    $region3: #{tpu_custom_call.1} parent=1 // loop_header
      %s15 = sphi 0, %s19
      %p16 = scmp.ge.s32.totalorder %s15, 4
      %s22 = sphi 0, %s41
      %s23 = sphi 0, %s37
      %s24 = sphi 0, %s33
      %s25 = sphi 0, %s22
      %s26 = sphi 0, %s23
      %s27 = sphi 0, %s24
      %s28 = sphi 0, %s25
      %s29 = sphi 0, %s26
      %s30 = sphi 0, %s27
      %s52 = sphi 0, %s54
      %s55 = sphi 0, %s52
      %s56 = sphi 0, %s55
      %s72 = sphi 0, %s56
      %s76 = sphi 0, %s76
      %s78 = sphi 0, %s76
      %s79 = sphi 0, %s78
      %s93 = sphi 0, %s79
      %s97 = sphi 0, %s97
      %s99 = sphi 0, %s97
      %s100 = sphi 0, %s99
      %s114 = sphi 0, %s100
      %s122 = sphi 0, %s124
      %s125 = sphi 0, %s122
      %s126 = sphi 0, %s125
      %s142 = sphi 0, %s126
    $region4: #{tpu_custom_call.1} parent=1 // loop_header_branch
      %18 = sbr.rel (%p16) target = $region8
    $region5: #{tpu_custom_call.1} parent=1 // loop_body
      %s20 = ssub.s32 %s15, 1
      %s21 = ssub.s32 %s15, 2
      %s31 = sadd.s32 1, %s24
      %p32 = scmp.ge.s32.totalorder %s31, 1
      %s33 = scalar_select %p32, 0, %s31
      %s34 = sadd.s32 1, %s23
      %s35 = scalar_select %p32, %s34, %s23
      %p36 = scmp.ge.s32.totalorder %s35, 1
      %s37 = scalar_select %p36, 0, %s35
      %s38 = sadd.s32 1, %s22
      %s39 = scalar_select %p36, %s38, %s22
      %p40 = scmp.ge.s32.totalorder %s39, 2
      %s41 = scalar_select %p40, 0, %s39
      %s42 = sadd.s32 %s23, %s24
      %p43 = scmp.lt.s32.totalorder %s42, 0
      %s44 = scalar_select %p43, %s42, 0
      %s45 = sadd.s32 %s37, %s33
      %p46 = scmp.lt.s32.totalorder %s45, 0
      %s47 = scalar_select %p46, %s45, 0
      %s48 = ssub.s32 %s22, %s41
      %s49 = ssub.s32 %s44, %s47
      %s50 = sor.u32 %s48, %s49
      %p51 = scmp.eq.s32.totalorder %s50, 0
      %s53 = sadd.s32 %s52, 1
      %s54 = scalar_select %p51, %s52, %s53
      %p57 = pneg %p51
      %p58 = scmp.eq.s32.totalorder %s15, 1
      %p59 = por %p57, %p58
      %p60 = scmp.ne.s32.totalorder %s52, %s55
      %p61 = scmp.eq.s32.totalorder %s15, 0
      %p62 = por %p60, %p61
      %p63 = scmp.ne.s32.totalorder %s52, %s55
      %p64 = scmp.eq.s32.totalorder %s20, 1
      %p65 = por %p63, %p64
      %p66 = scmp.ne.s32.totalorder %s55, %s56
      %p67 = scmp.eq.s32.totalorder %s20, 0
      %p68 = por %p66, %p67
      %p69 = scmp.ne.s32.totalorder %s55, %s56
      %p70 = scmp.eq.s32.totalorder %s21, 1
      %p71 = por %p69, %p70
      %p73 = scmp.ne.s32.totalorder %s56, %s72
      %p74 = scmp.eq.s32.totalorder %s21, 0
      %p75 = por %p73, %p74
      %s77 = sadd.s32 %s76, 1
      %p80 = scmp.eq.s32.totalorder %s15, 1
      %p81 = scmp.ne.s32.totalorder %s76, %s78
      %p82 = scmp.eq.s32.totalorder %s15, 0
      %p83 = por %p81, %p82
      %p84 = scmp.ne.s32.totalorder %s76, %s78
      %p85 = scmp.eq.s32.totalorder %s20, 1
      %p86 = por %p84, %p85
      %p87 = scmp.ne.s32.totalorder %s78, %s79
      %p88 = scmp.eq.s32.totalorder %s20, 0
      %p89 = por %p87, %p88
      %p90 = scmp.ne.s32.totalorder %s78, %s79
      %p91 = scmp.eq.s32.totalorder %s21, 1
      %p92 = por %p90, %p91
      %p94 = scmp.ne.s32.totalorder %s79, %s93
      %p95 = scmp.eq.s32.totalorder %s21, 0
      %p96 = por %p94, %p95
      %s98 = sadd.s32 %s97, 1
      %p101 = scmp.eq.s32.totalorder %s15, 1
      %p102 = scmp.ne.s32.totalorder %s97, %s99
      %p103 = scmp.eq.s32.totalorder %s15, 0
      %p104 = por %p102, %p103
      %p105 = scmp.ne.s32.totalorder %s97, %s99
      %p106 = scmp.eq.s32.totalorder %s20, 1
      %p107 = por %p105, %p106
      %p108 = scmp.ne.s32.totalorder %s99, %s100
      %p109 = scmp.eq.s32.totalorder %s20, 0
      %p110 = por %p108, %p109
      %p111 = scmp.ne.s32.totalorder %s99, %s100
      %p112 = scmp.eq.s32.totalorder %s21, 1
      %p113 = por %p111, %p112
      %p115 = scmp.ne.s32.totalorder %s100, %s114
      %p116 = scmp.eq.s32.totalorder %s21, 0
      %p117 = por %p115, %p116
      %s118 = ssub.s32 %s22, %s41
      %s119 = ssub.s32 %s23, %s37
      %s120 = sor.u32 %s118, %s119
      %p121 = scmp.eq.s32.totalorder %s120, 0
      %s123 = sadd.s32 %s122, 1
      %s124 = scalar_select %p121, %s122, %s123
      %p127 = pneg %p121
      %p128 = scmp.eq.s32.totalorder %s15, 1
      %p129 = por %p127, %p128
      %p130 = scmp.ne.s32.totalorder %s122, %s125
      %p131 = scmp.eq.s32.totalorder %s15, 0
      %p132 = por %p130, %p131
      %p133 = scmp.ne.s32.totalorder %s122, %s125
      %p134 = scmp.eq.s32.totalorder %s20, 1
      %p135 = por %p133, %p134
      %p136 = scmp.ne.s32.totalorder %s125, %s126
      %p137 = scmp.eq.s32.totalorder %s20, 0
      %p138 = por %p136, %p137
      %p139 = scmp.ne.s32.totalorder %s125, %s126
      %p140 = scmp.eq.s32.totalorder %s21, 1
      %p141 = por %p139, %p140
      %p143 = scmp.ne.s32.totalorder %s126, %s142
      %p144 = scmp.eq.s32.totalorder %s21, 0
      %p145 = por %p143, %p144
      %p146 = scmp.le.s32.totalorder 1, %s15
      %p147 = scmp.lt.s32.totalorder %s15, 3
      %p148 = pnand %p146, %p147
      %p149 = pneg %p148
      // Predicated region
      $region9: #{tpu_custom_call.1} parent=5 // pred_check
        _
      $region10: #{tpu_custom_call.1} parent=5 // pred_check_branch
        %151 = sbr.rel (%p148) target = $region12
      $region11: #{tpu_custom_call.1} parent=5 // pred_region
        %s152 = ssub.s32 %s15, 1
        // Predicated region
        $region13: #{tpu_custom_call.1} parent=11 // pred_check
          %p153 = pneg %p89
        $region14: #{tpu_custom_call.1} parent=11 // pred_check_branch
          %155 = sbr.rel (%p153) target = $region16
        $region15: #{tpu_custom_call.1} parent=11 // pred_region
          _
        $region16: #{tpu_custom_call.1} parent=11 // pred_fallthru
          _
        // Predicated region
        $region17: #{tpu_custom_call.1} parent=11 // pred_check
          %p156 = pneg %p110
        $region18: #{tpu_custom_call.1} parent=11 // pred_check_branch
          %158 = sbr.rel (%p156) target = $region20
        $region19: #{tpu_custom_call.1} parent=11 // pred_region
          _
        $region20: #{tpu_custom_call.1} parent=11 // pred_fallthru
          _
      $region12: #{tpu_custom_call.1} parent=5 // pred_fallthru
        _
      %p159 = scmp.lt.s32.totalorder %s15, 2
      // Predicated region
      $region21: #{tpu_custom_call.1} parent=5 // pred_check
        %p160 = pneg %p159
      $region22: #{tpu_custom_call.1} parent=5 // pred_check_branch
        %162 = sbr.rel (%p160) target = $region24
      $region23: #{tpu_custom_call.1} parent=5 // pred_region
        // Predicated region
        $region25: #{tpu_custom_call.1} parent=23 // pred_check
          %p163 = pneg %p62
        $region26: #{tpu_custom_call.1} parent=23 // pred_check_branch
          %165 = sbr.rel (%p163) target = $region28
        $region27: #{tpu_custom_call.1} parent=23 // pred_region
          %s166 = sand.u32 %s52, 1
          %s167 = scalar_lea.sflag [#allocation4], %s166
          %s168 = sand.u32 %s52, 1
          %s169 = smul.addr %s168, 8
          %s170 = scalar_lea.vmem [#allocation3], %s169
          %s171 = sadd.s32 %s23, %s24
          %p172 = scmp.lt.s32.totalorder %s171, 0
          %s173 = scalar_select %p172, %s171, 0
          %s175 = ssub.s32 128, 128
          %176 = vsyncadd %s167, %s175
          %s177 = sadd.s32 %s173, %s22
          %s178 = smul.addr %s177, 128
          %s179 = scalar_lea.hbm %s0, %s178
          %s181 = sshll.u32 %s170, 4
          %s182 = int_to_ptr.vmem [resolvable:$true] %s181
          %184 = dma.hbm_to_vmem [thread:$0]  %s179, 128, %s182, %s167
        $region28: #{tpu_custom_call.1} parent=23 // pred_fallthru
          _
      $region24: #{tpu_custom_call.1} parent=5 // pred_fallthru
        _
      %p185 = scmp.le.s32.totalorder 1, %s15
      %p186 = scmp.lt.s32.totalorder %s15, 3
      %p187 = pnand %p185, %p186
      %p188 = pneg %p187
      // Predicated region
      $region29: #{tpu_custom_call.1} parent=5 // pred_check
        _
      $region30: #{tpu_custom_call.1} parent=5 // pred_check_branch
        %190 = sbr.rel (%p187) target = $region32
      $region31: #{tpu_custom_call.1} parent=5 // pred_region
        %s191 = ssub.s32 %s15, 1
        %s192 = sand.u32 %s55, 1
        %s193 = scalar_lea.sflag [#allocation4], %s192
        %s194 = sand.u32 %s55, 1
        %s195 = smul.addr %s194, 8
        %s196 = scalar_lea.vmem [#allocation3], %s195
        // Predicated region
        $region33: #{tpu_custom_call.1} parent=31 // pred_check
          %p197 = pneg %p68
        $region34: #{tpu_custom_call.1} parent=31 // pred_check_branch
          %199 = sbr.rel (%p197) target = $region36
        $region35: #{tpu_custom_call.1} parent=31 // pred_region
          %200 = dma.done %s193, 128
        $region36: #{tpu_custom_call.1} parent=31 // pred_fallthru
          _
        %s201 = sand.u32 %s55, 1
        %s202 = scalar_lea.sflag [#allocation4], %s201
        %s203 = sand.u32 %s55, 1
        %s204 = smul.addr %s203, 8
        %s205 = scalar_lea.vmem [#allocation3], %s204
        %p206 = pneg %p68
        %p207 = pneg %p65
        %p208 = pneg %p89
        %p209 = pneg %p86
        %p210 = pneg %p110
        %p211 = pneg %p107
        %p212 = pneg %p138
        %p213 = pneg %p135
        %s214 = sand.u32 %s125, 1
        %s215 = scalar_lea.sflag [#allocation5], %s214
        %s216 = sand.u32 %s125, 1
        %s217 = scalar_lea.vmem [#allocation6], %s216
        %s218 = sadd.s32 %s26, %s27
        %p219 = scmp.lt.s32.totalorder %s218, 0
        %s220 = scalar_select %p219, %s218, 0
        %p221 = scmp.eq.s32.totalorder %s27, 0
        // Predicated region
        $region37: #{tpu_custom_call.1} parent=31 // pred_check
          %p222 = pneg %p221
        $region38: #{tpu_custom_call.1} parent=31 // pred_check_branch
          %224 = sbr.rel (%p222) target = $region40
        $region39: #{tpu_custom_call.1} parent=31 // pred_region
          %vm225 = vcmask 57344
          %226 = vst.msk [vmem:[#allocation2] sm:$0x1] %vm225, 0.0
        $region40: #{tpu_custom_call.1} parent=31 // pred_fallthru
          _
        %v227 = vld [vmem:[%s1] sm:$0xff]
        %v228 = vld [vmem:[%s1 + $0x8] sm:$0xff]
        %v229 = vld [vmem:[%s1 + $0x10] sm:$0xff]
        %v230 = vld [vmem:[%s1 + $0x18] sm:$0xff]
        %v231 = vld [vmem:[%s196] sm:$0xff]
        %vm232 = vcmask 261120
        %v234 = vsel %vm232, %v227, 0
        %v237 = vsel %vm232, %v228, 0
        %v240 = vsel %vm232, %v229, 0
        %v243 = vsel %vm232, %v230, 0
        %v246 = vsel %vm232, %v231, 0
        %248 = vmatprep.subr.mxu0 0.0
        %249 = vmatpush1.xpose.msra.mxu0 %v246
        %250 = vmatprep.subr.mxu0 0.0
        %251 = vmatpush1.xpose.msra.mxu0 0.0
        %252 = vmatprep.subr.mxu0 0.0
        %253 = vmatpush1.xpose.msra.mxu0 0.0
        %254 = vmatprep.subr.mxu0 0.0
        %255 = vmatpush1.xpose.msra.mxu0 0.0
        %256 = vmatprep.subr.mxu0 0.0
        %257 = vmatpush1.xpose.msra.mxu0 0.0
        %258 = vmatprep.subr.mxu0 0.0
        %259 = vmatpush1.xpose.msra.mxu0 0.0
        %260 = vmatprep.subr.mxu0 0.0
        %261 = vmatpush1.xpose.msra.mxu0 0.0
        %262 = vmatprep.subr.mxu0 0.0
        %263 = vmatpush1.xpose.msra.mxu0 0.0
        %264 = vmatprep.subr.mxu0 0.0
        %265 = vmatpush1.xpose.msra.mxu0 0.0
        %266 = vmatprep.subr.mxu0 0.0
        %267 = vmatpush1.xpose.msra.mxu0 0.0
        %268 = vmatprep.subr.mxu0 0.0
        %269 = vmatpush1.xpose.msra.mxu0 0.0
        %270 = vmatprep.subr.mxu0 0.0
        %271 = vmatpush1.xpose.msra.mxu0 0.0
        %272 = vmatprep.subr.mxu0 0.0
        %273 = vmatpush1.xpose.msra.mxu0 0.0
        %274 = vmatprep.subr.mxu0 0.0
        %275 = vmatpush1.xpose.msra.mxu0 0.0
        %276 = vmatprep.subr.mxu0 0.0
        %277 = vmatpush1.xpose.msra.mxu0 0.0
        %278 = vmatprep.subr.mxu0 0.0
        %279 = vmatpush1.xpose.msra.mxu0 0.0
        %280 = vmatprep.subr.mxu0 0.0
        %281 = vmatpush1.xpose.msra.mxu0 0.0
        %282 = vmatprep.subr.mxu0 0.0
        %283 = vmatpush1.xpose.msra.mxu0 0.0
        %284 = vmatprep.subr.mxu0 0.0
        %285 = vmatpush1.xpose.msra.mxu0 0.0
        %286 = vmatprep.subr.mxu0 0.0
        %287 = vmatpush1.xpose.msra.mxu0 0.0
        %288 = vmatprep.subr.mxu0 0.0
        %289 = vmatpush1.xpose.msra.mxu0 0.0
        %290 = vmatprep.subr.mxu0 0.0
        %291 = vmatpush1.xpose.msra.mxu0 0.0
        %292 = vmatprep.subr.mxu0 0.0
        %293 = vmatpush1.xpose.msra.mxu0 0.0
        %294 = vmatprep.subr.mxu0 0.0
        %295 = vmatpush1.xpose.msra.mxu0 0.0
        %296 = vmatprep.subr.mxu0 0.0
        %297 = vmatpush1.xpose.msra.mxu0 0.0
        %298 = vmatprep.subr.mxu0 0.0
        %299 = vmatpush1.xpose.msra.mxu0 0.0
        %300 = vmatprep.subr.mxu0 0.0
        %301 = vmatpush1.xpose.msra.mxu0 0.0
        %302 = vmatprep.subr.mxu0 0.0
        %303 = vmatpush1.xpose.msra.mxu0 0.0
        %304 = vmatprep.subr.mxu0 0.0
        %305 = vmatpush1.xpose.msra.mxu0 0.0
        %306 = vmatprep.subr.mxu0 0.0
        %307 = vmatpush1.xpose.msra.mxu0 0.0
        %308 = vmatprep.subr.mxu0 0.0
        %309 = vmatpush1.xpose.msra.mxu0 0.0
        %310 = vmatprep.subr.mxu0 0.0
        %311 = vmatpush1.xpose.msra.mxu0 0.0
        %312 = vmatprep.mubr.f32.mxu0 0.0
        %313 = vmatmul.mubr.f32.gmra.mrb[0].mxu0 %v234
        %v314 = vpop.f32.mrb[0].mxu0
        %v315 = vadd.f32 0.0, %v314
        %v316 = vpop.f32.mrb[0].mxu0
        %317 = vmatprep.mubr.f32.mxu0 0.0
        %318 = vmatmul.mubr.f32.gmra.mrb[0].mxu0 %v237
        %v319 = vpop.f32.mrb[0].mxu0
        %v320 = vadd.f32 0.0, %v319
        %v321 = vpop.f32.mrb[0].mxu0
        %322 = vmatprep.mubr.f32.mxu0 0.0
        %323 = vmatmul.mubr.f32.gmra.mrb[0].mxu0 %v240
        %v324 = vpop.f32.mrb[0].mxu0
        %v325 = vadd.f32 0.0, %v324
        %v326 = vpop.f32.mrb[0].mxu0
        %327 = vmatprep.mubr.f32.mxu0 0.0
        %328 = vmatmul.mubr.f32.gmra.mrb[0].mxu0 %v243
        %v329 = vpop.f32.mrb[0].mxu0
        %v330 = vadd.f32 0.0, %v329
        %v331 = vpop.f32.mrb[0].mxu0
        %332 = vdwg.mxu0
        %v333 = vmul.f32 %v315, 0.5
        %v334 = vmul.f32 %v320, 0.5
        %v335 = vmul.f32 %v325, 0.5
        %v336 = vmul.f32 %v330, 0.5
        %v337 = vmul.f32 %v315, 0.70710677
        %v338 = vmul.f32 %v320, 0.70710677
        %v339 = vmul.f32 %v325, 0.70710677
        %v340 = vmul.f32 %v330, 0.70710677
        %v341 = verf.f32.pop %v337
        %v342 = verf.f32.pop %v338
        %v343 = verf.f32.pop %v339
        %v344 = verf.f32.pop %v340
        %v345 = vadd.f32 %v341, 1.0
        %v346 = vadd.f32 %v342, 1.0
        %v347 = vadd.f32 %v343, 1.0
        %v348 = vadd.f32 %v344, 1.0
        %v349 = vmul.f32 %v333, %v345
        %v350 = vmul.f32 %v334, %v346
        %v351 = vmul.f32 %v335, %v347
        %v352 = vmul.f32 %v336, %v348
        %v353 = vld [vmem:[%s2] sm:$0xff]
        %v354 = vld [vmem:[%s2 + $0x8] sm:$0xff]
        %v355 = vld [vmem:[%s2 + $0x10] sm:$0xff]
        %v356 = vld [vmem:[%s2 + $0x18] sm:$0xff]
        %358 = vset.pattern.permute.xlu0 0
        %359 = vperm.xlu0 %358, %v353
        %v360 = vpop.permute.xlu0 %359
        %363 = vset.pattern.permute.xlu0 0
        %364 = vperm.xlu0 %363, %v354
        %v365 = vpop.permute.xlu0 %364
        %368 = vset.pattern.permute.xlu0 0
        %369 = vperm.xlu0 %368, %v355
        %v370 = vpop.permute.xlu0 %369
        %373 = vset.pattern.permute.xlu0 0
        %374 = vperm.xlu0 %373, %v356
        %v375 = vpop.permute.xlu0 %374
        %v377 = vmul.f32 %v349, %v360
        %v378 = vmul.f32 %v350, %v365
        %v379 = vmul.f32 %v351, %v370
        %v380 = vmul.f32 %v352, %v375
        %vm381 = vcmask 64512
        %v382 = vsel %vm381, %v377, 0.0
        %v383 = vsel %vm381, %v378, 0.0
        %v384 = vadd.f32 %v382, %v383
        %v385 = vsel %vm381, %v379, 0.0
        %v386 = vadd.f32 %v384, %v385
        %v387 = vsel %vm381, %v380, 0.0
        %v388 = vadd.f32 %v386, %v387
        %v389 = vrot.slane %v388, 4
        %v390 = vadd.f32 %v388, %v389
        %v391 = vrot.slane %v390, 2
        %v392 = vadd.f32 %v390, %v391
        %v393 = vrot.slane %v392, 1
        %v394 = vadd.f32 %v392, %v393
        %s395 = sadd.s32 %s26, %s27
        %s396 = smul.u32 %s395, 8
        %v397 = vlaneseq
        %v398 = vand.u32 %v397, 127
        %v399 = vstv %s396
        %v400 = vadd.s32 %v399, %v398
        %vm401 = vcmp.lt.s32.totalorder %v400, 8
        %v402 = vsel %vm401, %v394, 0.0
        %v403 = vld [vmem:[#allocation2] sm:$0x1]
        %v404 = vadd.f32 %v403, %v402
        %vm405 = vcmask 57344
        %406 = vst.msk [vmem:[#allocation2] sm:$0x1] %vm405, %v404
        // Predicated region
        $region41: #{tpu_custom_call.1} parent=31 // pred_check
          %p407 = pneg %p221
        $region42: #{tpu_custom_call.1} parent=31 // pred_check_branch
          %409 = sbr.rel (%p407) target = $region44
        $region43: #{tpu_custom_call.1} parent=31 // pred_region
          %v410 = vld [vmem:[#allocation2] sm:$0x1]
          %v411 = vsel %vm405, %v410, 0.0
          %412 = vadd.xlane.f32.xlu0 %v411
          %v413 = vpop.xlane.xlu0 %412
          %v414 = vmul.f32 %v413, 0.125
          %415 = vst [vmem:[%s217] sm:$0x1] %v414
        $region44: #{tpu_custom_call.1} parent=31 // pred_fallthru
          _
        %s416 = sand.u32 %s125, 1
        %s417 = scalar_lea.sflag [#allocation5], %s416
        %s418 = sand.u32 %s125, 1
        %s419 = scalar_lea.vmem [#allocation6], %s418
        // Predicated region
        $region45: #{tpu_custom_call.1} parent=31 // pred_check
          %p420 = pneg %p135
        $region46: #{tpu_custom_call.1} parent=31 // pred_check_branch
          %422 = sbr.rel (%p420) target = $region48
        $region47: #{tpu_custom_call.1} parent=31 // pred_region
          %s424 = ssub.s32 16, 16
          %425 = vsyncadd %s417, %s424
          %s426 = sadd.s32 %s26, %s25
          %s427 = smul.addr %s426, 16
          %s428 = scalar_lea.hbm %s3, %s427
          %s430 = sshll.u32 %s419, 4
          %s431 = int_to_ptr.vmem [resolvable:$true] %s430
          %433 = dma.vmem_to_hbm [thread:$0]  %s431, 16, %s428, %s417
        $region48: #{tpu_custom_call.1} parent=31 // pred_fallthru
          _
      $region32: #{tpu_custom_call.1} parent=5 // pred_fallthru
        _
      %p434 = scmp.le.s32.totalorder 2, %s15
      // Predicated region
      $region49: #{tpu_custom_call.1} parent=5 // pred_check
        %p435 = pneg %p434
      $region50: #{tpu_custom_call.1} parent=5 // pred_check_branch
        %437 = sbr.rel (%p435) target = $region52
      $region51: #{tpu_custom_call.1} parent=5 // pred_region
        %s438 = ssub.s32 %s15, 2
        // Predicated region
        $region53: #{tpu_custom_call.1} parent=51 // pred_check
          %p439 = pneg %p141
        $region54: #{tpu_custom_call.1} parent=51 // pred_check_branch
          %441 = sbr.rel (%p439) target = $region56
        $region55: #{tpu_custom_call.1} parent=51 // pred_region
          %s442 = sand.u32 %s126, 1
          %s443 = scalar_lea.sflag [#allocation5], %s442
          %s444 = sand.u32 %s126, 1
          %s445 = scalar_lea.vmem [#allocation6], %s444
          %446 = dma.done %s443, 16
        $region56: #{tpu_custom_call.1} parent=51 // pred_fallthru
          _
      $region52: #{tpu_custom_call.1} parent=5 // pred_fallthru
        _
    $region6: #{tpu_custom_call.1} parent=1 // loop_footer
      %s19 = sadd.s32 1, %s15
    $region7: #{tpu_custom_call.1} parent=1 // loop_footer_branch
      %14 = sbr.rel target = $region3
    $region8: #{tpu_custom_call.1} parent=1 // loop_exit
      _
    %447 = vsyncpa [#allocation4], 1
    %s448 = scalar_lea.sflag [#allocation4], 1
    %449 = vsyncpa %s448, 1
    %450 = vsyncpa [#allocation5], 1
    %s451 = scalar_lea.sflag [#allocation5], 1
    %452 = vsyncpa %s451, 1

</llo_original>
